<compile_context>
chip_gen: v6e
topology: v6e:2x2x1
jax: 0.10.0
libtpu: 0.0.40
codegen_flags: <defaults>
</compile_context>

<pallas_src>
import jax
import jax.numpy as jnp
from jax.experimental import pallas as pl
from jax.experimental.pallas import tpu as pltpu


def _search_transfer_kernel(lr_ref, rfn_ref, r1_ref, s_ref, t_ref):
    eps = 1e-12
    lr = lr_ref[...]     # (C,  TQ) un-normalized query tile
    rfn = rfn_ref[...]   # (Nr, C)  pre-normalized keys (resident across q-tiles)
    r1 = r1_ref[...]     # (C1, Nr) reference values   (resident across q-tiles)

    # MXU-native (M, K) @ (K, N) contraction -> (Nr, TQ)
    scores = jax.lax.dot_general(
        rfn, lr, (((1,), (0,)), ((), ())),
        preferred_element_type=jnp.float32)

    nr = scores.shape[0]
    m = jnp.max(scores, axis=0, keepdims=True)            # (1, TQ)

    # First index attaining the max (column iota broadcasts; no (Nr,TQ) iota temp).
    row = jax.lax.broadcasted_iota(jnp.int32, (nr, 1), 0)  # (Nr, 1)
    idx = jnp.min(jnp.where(scores == m, row, nr),
                  axis=0, keepdims=True)                   # (1, TQ)

    # Gather along the reference dim as an exact one-hot matmul on the MXU.
    onehot = (row == idx).astype(jnp.float32)              # (Nr, TQ)
    t_ref[...] = jnp.dot(r1, onehot, preferred_element_type=jnp.float32)

    # Deferred query-side normalization: only the max needs dividing by the query norm.
    qn = jnp.maximum(jnp.sqrt(jnp.sum(lr * lr, axis=0, keepdims=True)), eps)
    s_ref[...] = m / qn


def _choose_tq(nq, nr, c, c1, budget_bytes=24 << 20):
    """Pick a lane-aligned query-tile size that keeps the VMEM footprint modest
    (resident keys/values + ~3x score-sized temporaries + double-buffered tiles)."""
    resident = 2 * (nr * c + c1 * nr) * 4                 # rf + r1, double-buffered
    avail = max(budget_bytes - resident, 1 << 20)
    per_col = (3 * nr + 2 * c + 2 * c1 + 8) * 4           # scores/where/onehot + lr/out tiles
    tq = max(128, min(1024, (avail // per_col) // 128 * 128))
    nq_pad = pl.cdiv(nq, 128) * 128
    return min(tq, nq_pad)


def search_transfer(lrsr_lv3, refsr_lv3, ref_lv1, *, tq=None):
    """JAX/Pallas equivalent of SearchTransfer.forward (NCHW inputs)."""
    B, C, H, W = lrsr_lv3.shape
    Hr, Wr = refsr_lv3.shape[-2:]
    C1 = ref_lv1.shape[1]
    Nq = H * W
    Nr = Hr * Wr
    eps = 1e-12

    # F.unfold with a 1x1 kernel is a spatial flatten.
    lr = lrsr_lv3.reshape(B, C, Nq).astype(jnp.float32)
    r1 = ref_lv1.reshape(B, C1, Nr).astype(jnp.float32)

    # Hoisted key normalization + transpose to (B, Nr, C): one XLA pass, done once.
    rfn = refsr_lv3.reshape(B, C, Nr).transpose(0, 2, 1).astype(jnp.float32)
    rfn = rfn / jnp.maximum(
        jnp.sqrt(jnp.sum(rfn * rfn, axis=2, keepdims=True)), eps)

    if tq is None:
        tq = _choose_tq(Nq, Nr, C, C1)
    nq_pad = pl.cdiv(Nq, tq) * tq
    if nq_pad != Nq:
        # Zero-padded query columns produce zero scores / zero S; cropped below.
        lr = jnp.pad(lr, ((0, 0), (0, 0), (0, nq_pad - Nq)))

    grid = (B, nq_pad // tq)

    cost = pl.CostEstimate(
        flops=2 * B * Nr * nq_pad * (C + C1),
        transcendentals=0,
        bytes_accessed=4 * B * (C * nq_pad + Nr * C + C1 * Nr
                                + nq_pad + C1 * nq_pad),
    )

    s_flat, t_flat = pl.pallas_call(
        _search_transfer_kernel,
        out_shape=(
            jax.ShapeDtypeStruct((B, 1, nq_pad), jnp.float32),
            jax.ShapeDtypeStruct((B, C1, nq_pad), jnp.float32),
        ),
        grid=grid,
        in_specs=[
            pl.BlockSpec((None, C, tq), lambda b, q: (b, 0, q)),    # lr query tile
            pl.BlockSpec((None, Nr, C), lambda b, q: (b, 0, 0)),    # keys, resident
            pl.BlockSpec((None, C1, Nr), lambda b, q: (b, 0, 0)),   # values, resident
        ],
        out_specs=(
            pl.BlockSpec((None, 1, tq), lambda b, q: (b, 0, q)),
            pl.BlockSpec((None, C1, tq), lambda b, q: (b, 0, q)),
        ),
        compiler_params=pltpu.CompilerParams(
            dimension_semantics=("parallel", "parallel"),
            vmem_limit_bytes=48 * 1024 * 1024,
        ),
        cost_estimate=cost,
    )(lr, rfn, r1)

    # F.fold with a 1x1 kernel is just a reshape back to spatial (crop padding first).
    S = s_flat[:, :, :Nq].reshape(B, 1, H, W)
    T_lv1 = t_flat[:, :, :Nq].reshape(B, C1, H, W)
    return S, T_lv1


def _reference(lrsr_lv3, refsr_lv3, ref_lv1):
    """Pure-JAX reference mirroring the PyTorch module."""
    B, C, H, W = lrsr_lv3.shape
    Hr, Wr = refsr_lv3.shape[-2:]
    C1 = ref_lv1.shape[1]
    eps = 1e-12
    lr = lrsr_lv3.reshape(B, C, H * W)
    rf = refsr_lv3.reshape(B, C, Hr * Wr).transpose(0, 2, 1)           # (B, Nr, C)
    rf = rf / jnp.maximum(jnp.linalg.norm(rf, axis=2, keepdims=True), eps)
    lr = lr / jnp.maximum(jnp.linalg.norm(lr, axis=1, keepdims=True), eps)
    R = jnp.einsum('brc,bcq->brq', rf, lr)                              # (B, Nr, Nq)
    R_star = jnp.max(R, axis=1)                                         # (B, Nq)
    R_arg = jnp.argmax(R, axis=1)                                       # (B, Nq)
    r1 = ref_lv1.reshape(B, C1, Hr * Wr)
    T = jnp.take_along_axis(r1, R_arg[:, None, :].repeat(C1, axis=1), axis=2)
    return R_star.reshape(B, 1, H, W), T.reshape(B, C1, H, W)


if __name__ == "__main__":
    key = jax.random.PRNGKey(0)
    k1, k2, k3 = jax.random.split(key, 3)
    B, C, H, W = 2, 4, 16, 16     # lrsr_lv3 / refsr_lv3 spatial
    C1 = 8                        # ref_lv1 channels (same 1x1 spatial grid as refsr_lv3)
    lrsr_lv3 = jax.random.normal(k1, (B, C, H, W), dtype=jnp.float32)
    refsr_lv3 = jax.random.normal(k2, (B, C, H, W), dtype=jnp.float32)
    ref_lv1 = jax.random.normal(k3, (B, C1, H, W), dtype=jnp.float32)

    S, T_lv1 = search_transfer(lrsr_lv3, refsr_lv3, ref_lv1)
    jax.block_until_ready((S, T_lv1))

    S_ref, T_ref = _reference(lrsr_lv3, refsr_lv3, ref_lv1)
    assert S.shape == (B, 1, H, W) and T_lv1.shape == (B, C1, H, W)
    assert jnp.allclose(S, S_ref, atol=1e-5, rtol=1e-5)
    assert jnp.allclose(T_lv1, T_ref, atol=1e-5, rtol=1e-5)
    print("KERNEL_OK")
</pallas_src>

<mosaic_0001>
module attributes {stable_mosaic.version = 11 : i64} {
  func.func @_search_transfer_kernel(%arg0: i32, %arg1: i32, %arg2: memref<1x4x256xf32, #tpu.memory_space<vmem>>, %arg3: memref<1x256x4xf32, #tpu.memory_space<vmem>>, %arg4: memref<1x8x256xf32, #tpu.memory_space<vmem>>, %arg5: memref<1x1x256xf32, #tpu.memory_space<vmem>>, %arg6: memref<1x8x256xf32, #tpu.memory_space<vmem>>) attributes {dimension_semantics = [#tpu.dimension_semantics<parallel>, #tpu.dimension_semantics<parallel>], iteration_bounds = array<i64: 2, 1>, scalar_prefetch = 0 : i64, scratch_operands = 0 : i64, tpu.core_type = #tpu.core_type<tc>, window_params = [{transform_indices = @transform_0, window_bounds = array<i64: 1, 4, 256>}, {transform_indices = @transform_1, window_bounds = array<i64: 1, 256, 4>}, {transform_indices = @transform_2, window_bounds = array<i64: 1, 8, 256>}, {transform_indices = @transform_3, window_bounds = array<i64: 1, 1, 256>}, {transform_indices = @transform_4, window_bounds = array<i64: 1, 8, 256>}]} {
    %c0 = arith.constant 0 : index
    %c0_0 = arith.constant 0 : index
    %c0_1 = arith.constant 0 : index
    %0 = vector.load %arg2[%c0, %c0_0, %c0_1] : memref<1x4x256xf32, #tpu.memory_space<vmem>>, vector<1x4x256xf32>
    %1 = vector.shape_cast %0 : vector<1x4x256xf32> to vector<4x256xf32>
    %c0_2 = arith.constant 0 : index
    %c0_3 = arith.constant 0 : index
    %c0_4 = arith.constant 0 : index
    %2 = vector.load %arg3[%c0_2, %c0_3, %c0_4] : memref<1x256x4xf32, #tpu.memory_space<vmem>>, vector<1x256x4xf32>
    %3 = vector.shape_cast %2 : vector<1x256x4xf32> to vector<256x4xf32>
    %c0_5 = arith.constant 0 : index
    %c0_6 = arith.constant 0 : index
    %c0_7 = arith.constant 0 : index
    %4 = vector.load %arg4[%c0_5, %c0_6, %c0_7] : memref<1x8x256xf32, #tpu.memory_space<vmem>>, vector<1x8x256xf32>
    %5 = vector.shape_cast %4 : vector<1x8x256xf32> to vector<8x256xf32>
    %cst = arith.constant dense<0.000000e+00> : vector<256x256xf32>
    %6 = tpu.matmul %3, %1, %cst {dimension_numbers = #tpu.dot_dimension_numbers<[1], [0], [0], [1], [0, 0, 1, 1], [], []>} : vector<256x4xf32>, vector<4x256xf32>, vector<256x256xf32> -> vector<256x256xf32>
    %cst_8 = arith.constant dense<0xFF800000> : vector<256xf32>
    %7 = vector.multi_reduction <maximumf>, %6, %cst_8 [0] : vector<256x256xf32> to vector<256xf32>
    %8 = vector.shape_cast %7 : vector<256xf32> to vector<1x256xf32>
    %9 = tpu.iota {dimensions = array<i32: 0>} : vector<256x1xi32>
    %10 = vector.broadcast %8 : vector<1x256xf32> to vector<256x256xf32>
    %11 = arith.cmpf oeq, %6, %10 : vector<256x256xf32>
    %c256_i32 = arith.constant 256 : i32
    %12 = vector.shape_cast %9 : vector<256x1xi32> to vector<256x1xi32>
    %13 = vector.broadcast %12 : vector<256x1xi32> to vector<256x256xi32>
    %14 = vector.broadcast %c256_i32 : i32 to vector<256x256xi32>
    %15 = arith.select %11, %13, %14 : vector<256x256xi1>, vector<256x256xi32>
    %cst_9 = arith.constant dense<2147483647> : vector<256xi32>
    %16 = vector.multi_reduction <minsi>, %15, %cst_9 [0] : vector<256x256xi32> to vector<256xi32>
    %17 = vector.shape_cast %16 : vector<256xi32> to vector<1x256xi32>
    %18 = vector.broadcast %9 : vector<256x1xi32> to vector<256x256xi32>
    %19 = vector.broadcast %17 : vector<1x256xi32> to vector<256x256xi32>
    %20 = arith.cmpi eq, %18, %19 : vector<256x256xi32>
    %21 = arith.extui %20 : vector<256x256xi1> to vector<256x256xi32>
    %22 = arith.sitofp %21 : vector<256x256xi32> to vector<256x256xf32>
    %cst_10 = arith.constant dense<0.000000e+00> : vector<8x256xf32>
    %23 = tpu.matmul %5, %22, %cst_10 {dimension_numbers = #tpu.dot_dimension_numbers<[1], [0], [0], [1], [0, 0, 1, 1], [], []>} : vector<8x256xf32>, vector<256x256xf32>, vector<8x256xf32> -> vector<8x256xf32>
    %c0_11 = arith.constant 0 : index
    %c0_12 = arith.constant 0 : index
    %c0_13 = arith.constant 0 : index
    %24 = vector.load %arg6[%c0_11, %c0_12, %c0_13] : memref<1x8x256xf32, #tpu.memory_space<vmem>>, vector<1x8x256xf32>
    %25 = vector.shape_cast %24 : vector<1x8x256xf32> to vector<8x256xf32>
    %26 = vector.shape_cast %23 : vector<8x256xf32> to vector<1x8x256xf32>
    tpu.vector_store %arg6[%c0_11, %c0_12, %c0_13], %26 {strides = array<i32>} : memref<1x8x256xf32, #tpu.memory_space<vmem>>, vector<1x8x256xf32>,
    %27 = arith.mulf %1, %1 : vector<4x256xf32>
    %cst_14 = arith.constant dense<0.000000e+00> : vector<256xf32>
    %28 = vector.multi_reduction <add>, %27, %cst_14 [0] : vector<4x256xf32> to vector<256xf32>
    %29 = vector.shape_cast %28 : vector<256xf32> to vector<1x256xf32>
    %30 = math.sqrt %29 : vector<1x256xf32>
    %cst_15 = arith.constant 9.99999996E-13 : f32
    %31 = vector.broadcast %cst_15 : f32 to vector<1x256xf32>
    %32 = arith.maximumf %30, %31 : vector<1x256xf32>
    %33 = arith.divf %8, %32 : vector<1x256xf32>
    %c0_16 = arith.constant 0 : index
    %c0_17 = arith.constant 0 : index
    %c0_18 = arith.constant 0 : index
    %34 = vector.load %arg5[%c0_16, %c0_17, %c0_18] : memref<1x1x256xf32, #tpu.memory_space<vmem>>, vector<1x1x256xf32>
    %35 = vector.shape_cast %34 : vector<1x1x256xf32> to vector<1x256xf32>
    %36 = vector.shape_cast %33 : vector<1x256xf32> to vector<1x1x256xf32>
    tpu.vector_store %arg5[%c0_16, %c0_17, %c0_18], %36 {strides = array<i32>} : memref<1x1x256xf32, #tpu.memory_space<vmem>>, vector<1x1x256xf32>,
    return
  }
  func.func @transform_0(%arg0: i32, %arg1: i32) -> (i32, i32, i32) {
    %c0_i32 = arith.constant 0 : i32
    %c0_i32_0 = arith.constant 0 : i32
    return %arg0, %c0_i32, %arg1 : i32, i32, i32
  }
  func.func @transform_1(%arg0: i32, %arg1: i32) -> (i32, i32, i32) {
    %c0_i32 = arith.constant 0 : i32
    %c0_i32_0 = arith.constant 0 : i32
    %c0_i32_1 = arith.constant 0 : i32
    return %arg0, %c0_i32, %c0_i32_0 : i32, i32, i32
  }
  func.func @transform_2(%arg0: i32, %arg1: i32) -> (i32, i32, i32) {
    %c0_i32 = arith.constant 0 : i32
    %c0_i32_0 = arith.constant 0 : i32
    %c0_i32_1 = arith.constant 0 : i32
    return %arg0, %c0_i32, %c0_i32_0 : i32, i32, i32
  }
  func.func @transform_3(%arg0: i32, %arg1: i32) -> (i32, i32, i32) {
    %c0_i32 = arith.constant 0 : i32
    %c0_i32_0 = arith.constant 0 : i32
    return %arg0, %c0_i32, %arg1 : i32, i32, i32
  }
  func.func @transform_4(%arg0: i32, %arg1: i32) -> (i32, i32, i32) {
    %c0_i32 = arith.constant 0 : i32
    %c0_i32_0 = arith.constant 0 : i32
    return %arg0, %c0_i32, %arg1 : i32, i32, i32
  }
}

</mosaic_0001>

<llo_original>
// kernel: tpu_custom_call.1
$region0: #{tpu_custom_call.1}
  #allocation0 [shape = 'u32[]', space=smem, size = 0x4, offset = 0x4, fixed_abs, tag = 'smem constant byte address 0x4 - core index']
  #allocation1 [shape = 'u32[144,128]{1,0:T(1,128)}', space=vmem, size = 0x12000, scoped, tag = 'internal scratch']
  %s0 = inlined_call_operand.vmem [shape: f32[2,4,256], index: 0, kind: input, shape index: {}]
  %s1 = inlined_call_operand.vmem [shape: f32[2,256,4], index: 1, kind: input, shape index: {}]
  %s2 = inlined_call_operand.vmem [shape: f32[2,8,256], index: 2, kind: input, shape index: {}]
  %s3 = inlined_call_operand.hbm [shape: f32[2,1,256], index: 3, kind: output, shape index: {0}]
  %s4 = inlined_call_operand.hbm [shape: f32[2,8,256], index: 4, kind: output, shape index: {1}]
  %5 = xla_tuple %s3, %s4
  %s6 = sld [smem:[#allocation0]]
  $region53: #{tpu_custom_call.1} parent=0
    _
  %s8 = ssub.s32 1, %s6
  %s9 = scalar_select 0, %s8, %s6
  $region1: #{tpu_custom_call.1} parent=0
    #allocation2 [shape = 'u8[2048]{0}', space=vmem, size = 0x800, scoped, tag = 'output window, operand 0']
    #allocation3 [shape = 's32[2]{0}', space=sflag, size = 0x8, scoped, tag = 'scoped memory for tpu_custom_call.1']
    #allocation4 [shape = 'u8[16384]{0}', space=vmem, size = 0x4000, scoped, tag = 'output window, operand 1']
    #allocation5 [shape = 's32[2]{0}', space=sflag, size = 0x8, scoped, tag = 'scoped memory for tpu_custom_call.1']
    %10 = vsyncpa [#allocation3], 0
    %s11 = scalar_lea.sflag [#allocation3], 1
    %12 = vsyncpa %s11, 0
    %13 = vsyncpa [#allocation5], 0
    %s14 = scalar_lea.sflag [#allocation5], 1
    %15 = vsyncpa %s14, 0
    loop: start=0, step=1, limit=4
    $region2: #{tpu_custom_call.1} parent=1 // loop_pre_header
      _
    $region3: #{tpu_custom_call.1} parent=1 // loop_header
      %s17 = sphi 0, %s21
      %p18 = scmp.ge.s32.totalorder %s17, 4
      %s24 = sphi 0, %s36
      %s25 = sphi 0, %s32
      %s26 = sphi 0, %s24
      %s27 = sphi 0, %s25
      %s28 = sphi 0, %s26
      %s29 = sphi 0, %s27
      %s41 = sphi 0, %s43
      %s44 = sphi 0, %s41
      %s45 = sphi 0, %s44
      %s61 = sphi 0, %s45
      %s67 = sphi 0, %s69
      %s70 = sphi 0, %s67
      %s71 = sphi 0, %s70
      %s87 = sphi 0, %s71
      %s93 = sphi 0, %s95
      %s96 = sphi 0, %s93
      %s97 = sphi 0, %s96
      %s113 = sphi 0, %s97
      %s121 = sphi 0, %s123
      %s124 = sphi 0, %s121
      %s125 = sphi 0, %s124
      %s141 = sphi 0, %s125
      %s149 = sphi 0, %s151
      %s152 = sphi 0, %s149
      %s153 = sphi 0, %s152
      %s169 = sphi 0, %s153
    $region4: #{tpu_custom_call.1} parent=1 // loop_header_branch
      %20 = sbr.rel (%p18) target = $region8
    $region5: #{tpu_custom_call.1} parent=1 // loop_body
      %s22 = ssub.s32 %s17, 1
      %s23 = ssub.s32 %s17, 2
      %s30 = sadd.s32 1, %s25
      %p31 = scmp.ge.s32.totalorder %s30, 1
      %s32 = scalar_select %p31, 0, %s30
      %s33 = sadd.s32 1, %s24
      %s34 = scalar_select %p31, %s33, %s24
      %p35 = scmp.ge.s32.totalorder %s34, 2
      %s36 = scalar_select %p35, 0, %s34
      %s37 = ssub.s32 %s24, %s36
      %s38 = ssub.s32 %s25, %s32
      %s39 = sor.u32 %s37, %s38
      %p40 = scmp.eq.s32.totalorder %s39, 0
      %s42 = sadd.s32 %s41, 1
      %s43 = scalar_select %p40, %s41, %s42
      %p46 = pneg %p40
      %p47 = scmp.eq.s32.totalorder %s17, 1
      %p48 = por %p46, %p47
      %p49 = scmp.ne.s32.totalorder %s41, %s44
      %p50 = scmp.eq.s32.totalorder %s17, 0
      %p51 = por %p49, %p50
      %p52 = scmp.ne.s32.totalorder %s41, %s44
      %p53 = scmp.eq.s32.totalorder %s22, 1
      %p54 = por %p52, %p53
      %p55 = scmp.ne.s32.totalorder %s44, %s45
      %p56 = scmp.eq.s32.totalorder %s22, 0
      %p57 = por %p55, %p56
      %p58 = scmp.ne.s32.totalorder %s44, %s45
      %p59 = scmp.eq.s32.totalorder %s23, 1
      %p60 = por %p58, %p59
      %p62 = scmp.ne.s32.totalorder %s45, %s61
      %p63 = scmp.eq.s32.totalorder %s23, 0
      %p64 = por %p62, %p63
      %s65 = ssub.s32 %s24, %s36
      %p66 = scmp.eq.s32.totalorder %s65, 0
      %s68 = sadd.s32 %s67, 1
      %s69 = scalar_select %p66, %s67, %s68
      %p72 = pneg %p66
      %p73 = scmp.eq.s32.totalorder %s17, 1
      %p74 = por %p72, %p73
      %p75 = scmp.ne.s32.totalorder %s67, %s70
      %p76 = scmp.eq.s32.totalorder %s17, 0
      %p77 = por %p75, %p76
      %p78 = scmp.ne.s32.totalorder %s67, %s70
      %p79 = scmp.eq.s32.totalorder %s22, 1
      %p80 = por %p78, %p79
      %p81 = scmp.ne.s32.totalorder %s70, %s71
      %p82 = scmp.eq.s32.totalorder %s22, 0
      %p83 = por %p81, %p82
      %p84 = scmp.ne.s32.totalorder %s70, %s71
      %p85 = scmp.eq.s32.totalorder %s23, 1
      %p86 = por %p84, %p85
      %p88 = scmp.ne.s32.totalorder %s71, %s87
      %p89 = scmp.eq.s32.totalorder %s23, 0
      %p90 = por %p88, %p89
      %s91 = ssub.s32 %s24, %s36
      %p92 = scmp.eq.s32.totalorder %s91, 0
      %s94 = sadd.s32 %s93, 1
      %s95 = scalar_select %p92, %s93, %s94
      %p98 = pneg %p92
      %p99 = scmp.eq.s32.totalorder %s17, 1
      %p100 = por %p98, %p99
      %p101 = scmp.ne.s32.totalorder %s93, %s96
      %p102 = scmp.eq.s32.totalorder %s17, 0
      %p103 = por %p101, %p102
      %p104 = scmp.ne.s32.totalorder %s93, %s96
      %p105 = scmp.eq.s32.totalorder %s22, 1
      %p106 = por %p104, %p105
      %p107 = scmp.ne.s32.totalorder %s96, %s97
      %p108 = scmp.eq.s32.totalorder %s22, 0
      %p109 = por %p107, %p108
      %p110 = scmp.ne.s32.totalorder %s96, %s97
      %p111 = scmp.eq.s32.totalorder %s23, 1
      %p112 = por %p110, %p111
      %p114 = scmp.ne.s32.totalorder %s97, %s113
      %p115 = scmp.eq.s32.totalorder %s23, 0
      %p116 = por %p114, %p115
      %s117 = ssub.s32 %s24, %s36
      %s118 = ssub.s32 %s25, %s32
      %s119 = sor.u32 %s117, %s118
      %p120 = scmp.eq.s32.totalorder %s119, 0
      %s122 = sadd.s32 %s121, 1
      %s123 = scalar_select %p120, %s121, %s122
      %p126 = pneg %p120
      %p127 = scmp.eq.s32.totalorder %s17, 1
      %p128 = por %p126, %p127
      %p129 = scmp.ne.s32.totalorder %s121, %s124
      %p130 = scmp.eq.s32.totalorder %s17, 0
      %p131 = por %p129, %p130
      %p132 = scmp.ne.s32.totalorder %s121, %s124
      %p133 = scmp.eq.s32.totalorder %s22, 1
      %p134 = por %p132, %p133
      %p135 = scmp.ne.s32.totalorder %s124, %s125
      %p136 = scmp.eq.s32.totalorder %s22, 0
      %p137 = por %p135, %p136
      %p138 = scmp.ne.s32.totalorder %s124, %s125
      %p139 = scmp.eq.s32.totalorder %s23, 1
      %p140 = por %p138, %p139
      %p142 = scmp.ne.s32.totalorder %s125, %s141
      %p143 = scmp.eq.s32.totalorder %s23, 0
      %p144 = por %p142, %p143
      %s145 = ssub.s32 %s24, %s36
      %s146 = ssub.s32 %s25, %s32
      %s147 = sor.u32 %s145, %s146
      %p148 = scmp.eq.s32.totalorder %s147, 0
      %s150 = sadd.s32 %s149, 1
      %s151 = scalar_select %p148, %s149, %s150
      %p154 = pneg %p148
      %p155 = scmp.eq.s32.totalorder %s17, 1
      %p156 = por %p154, %p155
      %p157 = scmp.ne.s32.totalorder %s149, %s152
      %p158 = scmp.eq.s32.totalorder %s17, 0
      %p159 = por %p157, %p158
      %p160 = scmp.ne.s32.totalorder %s149, %s152
      %p161 = scmp.eq.s32.totalorder %s22, 1
      %p162 = por %p160, %p161
      %p163 = scmp.ne.s32.totalorder %s152, %s153
      %p164 = scmp.eq.s32.totalorder %s22, 0
      %p165 = por %p163, %p164
      %p166 = scmp.ne.s32.totalorder %s152, %s153
      %p167 = scmp.eq.s32.totalorder %s23, 1
      %p168 = por %p166, %p167
      %p170 = scmp.ne.s32.totalorder %s153, %s169
      %p171 = scmp.eq.s32.totalorder %s23, 0
      %p172 = por %p170, %p171
      %p173 = scmp.le.s32.totalorder 1, %s17
      %p174 = scmp.lt.s32.totalorder %s17, 3
      %p175 = pnand %p173, %p174
      %p176 = pneg %p175
      // Predicated region
      $region9: #{tpu_custom_call.1} parent=5 // pred_check
        _
      $region10: #{tpu_custom_call.1} parent=5 // pred_check_branch
        %178 = sbr.rel (%p175) target = $region12
      $region11: #{tpu_custom_call.1} parent=5 // pred_region
        %s179 = ssub.s32 %s17, 1
      $region12: #{tpu_custom_call.1} parent=5 // pred_fallthru
        _
      %p180 = scmp.lt.s32.totalorder %s17, 2
      // Predicated region
      $region13: #{tpu_custom_call.1} parent=5 // pred_check
        %p181 = pneg %p180
      $region14: #{tpu_custom_call.1} parent=5 // pred_check_branch
        %183 = sbr.rel (%p181) target = $region16
      $region15: #{tpu_custom_call.1} parent=5 // pred_region
        // Predicated region
        $region17: #{tpu_custom_call.1} parent=15 // pred_check
          %p184 = pneg %p51
        $region18: #{tpu_custom_call.1} parent=15 // pred_check_branch
          %186 = sbr.rel (%p184) target = $region20
        $region19: #{tpu_custom_call.1} parent=15 // pred_region
          %s187 = smul.u32 2, %s25
          %p188 = scmp.lt.s32.totalorder %s24, 1
          %s189 = scalar_select %p188, %s24, 1
          %p190 = scmp.lt.s32.totalorder %s187, 1
          %s191 = scalar_select %p190, %s187, 1
          %s192 = smul.addr %s189, 2
          %s193 = sadd.s32 %s191, %s192
          %s194 = smul.addr %s193, 4
          %s195 = scalar_lea.vmem %s0, %s194
          %s196 = smul.u32 2, %s25
        $region20: #{tpu_custom_call.1} parent=15 // pred_fallthru
          _
        // Predicated region
        $region21: #{tpu_custom_call.1} parent=15 // pred_check
          %p197 = pneg %p77
        $region22: #{tpu_custom_call.1} parent=15 // pred_check_branch
          %199 = sbr.rel (%p197) target = $region24
        $region23: #{tpu_custom_call.1} parent=15 // pred_region
          %p200 = scmp.lt.s32.totalorder %s24, 1
          %s201 = scalar_select %p200, %s24, 1
          %s202 = smul.addr %s201, 32
          %s203 = smul.addr %s202, 8
          %s204 = scalar_lea.vmem %s1, %s203
        $region24: #{tpu_custom_call.1} parent=15 // pred_fallthru
          _
        // Predicated region
        $region25: #{tpu_custom_call.1} parent=15 // pred_check
          %p205 = pneg %p103
        $region26: #{tpu_custom_call.1} parent=15 // pred_check_branch
          %207 = sbr.rel (%p205) target = $region28
        $region27: #{tpu_custom_call.1} parent=15 // pred_region
          %p208 = scmp.lt.s32.totalorder %s24, 1
          %s209 = scalar_select %p208, %s24, 1
          %s210 = smul.addr %s209, 2
          %s211 = smul.addr %s210, 8
          %s212 = scalar_lea.vmem %s2, %s211
        $region28: #{tpu_custom_call.1} parent=15 // pred_fallthru
          _
      $region16: #{tpu_custom_call.1} parent=5 // pred_fallthru
        _
      %p213 = scmp.le.s32.totalorder 1, %s17
      %p214 = scmp.lt.s32.totalorder %s17, 3
      %p215 = pnand %p213, %p214
      %p216 = pneg %p215
      // Predicated region
      $region29: #{tpu_custom_call.1} parent=5 // pred_check
        _
      $region30: #{tpu_custom_call.1} parent=5 // pred_check_branch
        %218 = sbr.rel (%p215) target = $region32
      $region31: #{tpu_custom_call.1} parent=5 // pred_region
        %s219 = ssub.s32 %s17, 1
        %s220 = smul.u32 2, %s27
        %p221 = scmp.lt.s32.totalorder %s26, 1
        %s222 = scalar_select %p221, %s26, 1
        %p223 = scmp.lt.s32.totalorder %s220, 1
        %s224 = scalar_select %p223, %s220, 1
        %s225 = smul.addr %s222, 2
        %s226 = sadd.s32 %s224, %s225
        %s227 = smul.addr %s226, 4
        %s228 = scalar_lea.vmem %s0, %s227
        %p229 = pneg %p57
        %p230 = pneg %p54
        %p231 = scmp.lt.s32.totalorder %s26, 1
        %s232 = scalar_select %p231, %s26, 1
        %s233 = smul.addr %s232, 32
        %s234 = smul.addr %s233, 8
        %s235 = scalar_lea.vmem %s1, %s234
        %p236 = pneg %p83
        %p237 = pneg %p80
        %p238 = scmp.lt.s32.totalorder %s26, 1
        %s239 = scalar_select %p238, %s26, 1
        %s240 = smul.addr %s239, 2
        %s241 = smul.addr %s240, 8
        %s242 = scalar_lea.vmem %s2, %s241
        %p243 = pneg %p109
        %p244 = pneg %p106
        %p245 = pneg %p137
        %p246 = pneg %p134
        %s247 = sand.u32 %s124, 1
        %s248 = scalar_lea.sflag [#allocation3], %s247
        %s249 = sand.u32 %s124, 1
        %s250 = smul.addr %s249, 2
        %s251 = scalar_lea.vmem [#allocation2], %s250
        %p252 = pneg %p165
        %p253 = pneg %p162
        %s254 = sand.u32 %s152, 1
        %s255 = scalar_lea.sflag [#allocation5], %s254
        %s256 = sand.u32 %s152, 1
        %s257 = smul.addr %s256, 16
        %s258 = scalar_lea.vmem [#allocation4], %s257
        %s259 = smul.u32 2, %s27
        %p260 = scmp.lt.s32.totalorder %s26, 1
        %s261 = scalar_select %p260, %s26, 1
        %p262 = scmp.lt.s32.totalorder %s259, 1
        %s263 = scalar_select %p262, %s259, 1
        %s264 = smul.addr %s261, 2
        %s265 = sadd.s32 %s263, %s264
        %s266 = smul.addr %s265, 4
        %s267 = scalar_lea.vmem %s0, %s266
        %s268 = smul.u32 2, %s27
        %p269 = scmp.lt.s32.totalorder %s26, 1
        %s270 = scalar_select %p269, %s26, 1
        %s271 = smul.addr %s270, 32
        %s272 = smul.addr %s271, 8
        %s273 = scalar_lea.vmem %s1, %s272
        %p274 = scmp.lt.s32.totalorder %s26, 1
        %s275 = scalar_select %p274, %s26, 1
        %s276 = smul.addr %s275, 2
        %s277 = smul.addr %s276, 8
        %s278 = scalar_lea.vmem %s2, %s277
        %s279 = smul.u32 2, %s27
        %s280 = smul.u32 2, %s27
        %v281 = vld [vmem:[%s267] sm:$0xff]
        %v282 = vld [vmem:[%s273] sm:$0xff]
        %v283 = vld [vmem:[%s273 + $0x8] sm:$0xff]
        %v284 = vld [vmem:[%s273 + $0x10] sm:$0xff]
        %v285 = vld [vmem:[%s273 + $0x18] sm:$0xff]
        %v286 = vld [vmem:[%s273 + $0x20] sm:$0xff]
        %v287 = vld [vmem:[%s273 + $0x28] sm:$0xff]
        %v288 = vld [vmem:[%s273 + $0x30] sm:$0xff]
        %v289 = vld [vmem:[%s273 + $0x38] sm:$0xff]
        %v290 = vld [vmem:[%s273 + $0x40] sm:$0xff]
        %v291 = vld [vmem:[%s273 + $0x48] sm:$0xff]
        %v292 = vld [vmem:[%s273 + $0x50] sm:$0xff]
        %v293 = vld [vmem:[%s273 + $0x58] sm:$0xff]
        %v294 = vld [vmem:[%s273 + $0x60] sm:$0xff]
        %v295 = vld [vmem:[%s273 + $0x68] sm:$0xff]
        %v296 = vld [vmem:[%s273 + $0x70] sm:$0xff]
        %v297 = vld [vmem:[%s273 + $0x78] sm:$0xff]
        %v298 = vld [vmem:[%s273 + $0x80] sm:$0xff]
        %v299 = vld [vmem:[%s273 + $0x88] sm:$0xff]
        %v300 = vld [vmem:[%s273 + $0x90] sm:$0xff]
        %v301 = vld [vmem:[%s273 + $0x98] sm:$0xff]
        %v302 = vld [vmem:[%s273 + $0xa0] sm:$0xff]
        %v303 = vld [vmem:[%s273 + $0xa8] sm:$0xff]
        %v304 = vld [vmem:[%s273 + $0xb0] sm:$0xff]
        %v305 = vld [vmem:[%s273 + $0xb8] sm:$0xff]
        %v306 = vld [vmem:[%s273 + $0xc0] sm:$0xff]
        %v307 = vld [vmem:[%s273 + $0xc8] sm:$0xff]
        %v308 = vld [vmem:[%s273 + $0xd0] sm:$0xff]
        %v309 = vld [vmem:[%s273 + $0xd8] sm:$0xff]
        %v310 = vld [vmem:[%s273 + $0xe0] sm:$0xff]
        %v311 = vld [vmem:[%s273 + $0xe8] sm:$0xff]
        %v312 = vld [vmem:[%s273 + $0xf0] sm:$0xff]
        %v313 = vld [vmem:[%s273 + $0xf8] sm:$0xff]
        %v314 = vld [vmem:[%s278] sm:$0xff]
        %v315 = vld [vmem:[%s278 + $0x8] sm:$0xff]
        %v317 = vcombine.high %v281, %v281
        %vm318 = vcmask 31744
        %v320 = vsel %vm318, %v282, 0
        %v323 = vsel %vm318, %v283, 0
        %v326 = vsel %vm318, %v284, 0
        %v329 = vsel %vm318, %v285, 0
        %v332 = vsel %vm318, %v286, 0
        %v335 = vsel %vm318, %v287, 0
        %v338 = vsel %vm318, %v288, 0
        %v341 = vsel %vm318, %v289, 0
        %v344 = vsel %vm318, %v290, 0
        %v347 = vsel %vm318, %v291, 0
        %v350 = vsel %vm318, %v292, 0
        %v353 = vsel %vm318, %v293, 0
        %v356 = vsel %vm318, %v294, 0
        %v359 = vsel %vm318, %v295, 0
        %v362 = vsel %vm318, %v296, 0
        %v365 = vsel %vm318, %v297, 0
        %v368 = vsel %vm318, %v298, 0
        %v371 = vsel %vm318, %v299, 0
        %v374 = vsel %vm318, %v300, 0
        %v377 = vsel %vm318, %v301, 0
        %v380 = vsel %vm318, %v302, 0
        %v383 = vsel %vm318, %v303, 0
        %v386 = vsel %vm318, %v304, 0
        %v389 = vsel %vm318, %v305, 0
        %v392 = vsel %vm318, %v306, 0
        %v395 = vsel %vm318, %v307, 0
        %v398 = vsel %vm318, %v308, 0
        %v401 = vsel %vm318, %v309, 0
        %v404 = vsel %vm318, %v310, 0
        %v407 = vsel %vm318, %v311, 0
        %v410 = vsel %vm318, %v312, 0
        %v413 = vsel %vm318, %v313, 0
        %vm415 = vcmask 1043456
        %v416 = vsel %vm415, %v281, 0
        %v418 = vsel %vm415, %v317, 0
        %420 = vmatprep.subr.mxu0 0.0
        %421 = vmatpush1.msra.mxu0 0.0
        %422 = vmatprep.subr.mxu0 0.0
        %423 = vmatpush1.msra.mxu0 0.0
        %424 = vmatprep.subr.mxu0 0.0
        %425 = vmatpush1.msra.mxu0 0.0
        %426 = vmatprep.subr.mxu0 0.0
        %427 = vmatpush1.msra.mxu0 0.0
        %428 = vmatprep.subr.mxu0 0.0
        %429 = vmatpush1.msra.mxu0 0.0
        %430 = vmatprep.subr.mxu0 0.0
        %431 = vmatpush1.msra.mxu0 0.0
        %432 = vmatprep.subr.mxu0 0.0
        %433 = vmatpush1.msra.mxu0 0.0
        %434 = vmatprep.subr.mxu0 0.0
        %435 = vmatpush1.msra.mxu0 0.0
        %436 = vmatprep.subr.mxu0 0.0
        %437 = vmatpush1.msra.mxu0 0.0
        %438 = vmatprep.subr.mxu0 0.0
        %439 = vmatpush1.msra.mxu0 0.0
        %440 = vmatprep.subr.mxu0 0.0
        %441 = vmatpush1.msra.mxu0 0.0
        %442 = vmatprep.subr.mxu0 0.0
        %443 = vmatpush1.msra.mxu0 0.0
        %444 = vmatprep.subr.mxu0 0.0
        %445 = vmatpush1.msra.mxu0 0.0
        %446 = vmatprep.subr.mxu0 0.0
        %447 = vmatpush1.msra.mxu0 0.0
        %448 = vmatprep.subr.mxu0 0.0
        %449 = vmatpush1.msra.mxu0 0.0
        %450 = vmatprep.subr.mxu0 %v418
        %451 = vmatpush1.msra.mxu0 %v416
        %452 = vmatprep.subr.mxu0 0.0
        %453 = vmatpush2.msra.mxu0 0.0
        %454 = vmatprep.subr.mxu0 0.0
        %455 = vmatpush2.msra.mxu0 0.0
        %456 = vmatprep.subr.mxu0 0.0
        %457 = vmatpush2.msra.mxu0 0.0
        %458 = vmatprep.subr.mxu0 0.0
        %459 = vmatpush2.msra.mxu0 0.0
        %460 = vmatprep.subr.mxu0 0.0
        %461 = vmatpush2.msra.mxu0 0.0
        %462 = vmatprep.subr.mxu0 0.0
        %463 = vmatpush2.msra.mxu0 0.0
        %464 = vmatprep.subr.mxu0 0.0
        %465 = vmatpush2.msra.mxu0 0.0
        %466 = vmatprep.subr.mxu0 0.0
        %467 = vmatpush2.msra.mxu0 0.0
        %468 = vmatprep.subr.mxu0 0.0
        %469 = vmatpush2.msra.mxu0 0.0
        %470 = vmatprep.subr.mxu0 0.0
        %471 = vmatpush2.msra.mxu0 0.0
        %472 = vmatprep.subr.mxu0 0.0
        %473 = vmatpush2.msra.mxu0 0.0
        %474 = vmatprep.subr.mxu0 0.0
        %475 = vmatpush2.msra.mxu0 0.0
        %476 = vmatprep.subr.mxu0 0.0
        %477 = vmatpush2.msra.mxu0 0.0
        %478 = vmatprep.subr.mxu0 0.0
        %479 = vmatpush2.msra.mxu0 0.0
        %480 = vmatprep.subr.mxu0 0.0
        %481 = vmatpush2.msra.mxu0 0.0
        %482 = vmatprep.subr.mxu0 0.0
        %483 = vmatpush2.msra.mxu0 0.0
        %484 = vmatprep.mubr.f32.mxu0 0.0
        %485 = vmatmul.mubr.f32.gmra.mxu0 %v320
        %v486 = vpop.f32.mrf.mxu0
        %v487 = vadd.f32 0.0, %v486
        %v488 = vpop.f32.mrf.mxu0
        %v489 = vadd.f32 0.0, %v488
        %490 = vmatprep.mubr.f32.mxu0 0.0
        %491 = vmatmul.mubr.f32.gmra.mxu0 %v323
        %v492 = vpop.f32.mrf.mxu0
        %v493 = vadd.f32 0.0, %v492
        %v494 = vpop.f32.mrf.mxu0
        %v495 = vadd.f32 0.0, %v494
        %496 = vmatprep.mubr.f32.mxu0 0.0
        %497 = vmatmul.mubr.f32.gmra.mxu0 %v326
        %v498 = vpop.f32.mrf.mxu0
        %v499 = vadd.f32 0.0, %v498
        %v500 = vpop.f32.mrf.mxu0
        %v501 = vadd.f32 0.0, %v500
        %502 = vmatprep.mubr.f32.mxu0 0.0
        %503 = vmatmul.mubr.f32.gmra.mxu0 %v329
        %v504 = vpop.f32.mrf.mxu0
        %v505 = vadd.f32 0.0, %v504
        %v506 = vpop.f32.mrf.mxu0
        %v507 = vadd.f32 0.0, %v506
        %508 = vmatprep.mubr.f32.mxu0 0.0
        %509 = vmatmul.mubr.f32.gmra.mxu0 %v332
        %v510 = vpop.f32.mrf.mxu0
        %v511 = vadd.f32 0.0, %v510
        %v512 = vpop.f32.mrf.mxu0
        %v513 = vadd.f32 0.0, %v512
        %514 = vmatprep.mubr.f32.mxu0 0.0
        %515 = vmatmul.mubr.f32.gmra.mxu0 %v335
        %v516 = vpop.f32.mrf.mxu0
        %v517 = vadd.f32 0.0, %v516
        %v518 = vpop.f32.mrf.mxu0
        %v519 = vadd.f32 0.0, %v518
        %520 = vmatprep.mubr.f32.mxu0 0.0
        %521 = vmatmul.mubr.f32.gmra.mxu0 %v338
        %v522 = vpop.f32.mrf.mxu0
        %v523 = vadd.f32 0.0, %v522
        %v524 = vpop.f32.mrf.mxu0
        %v525 = vadd.f32 0.0, %v524
        %526 = vmatprep.mubr.f32.mxu0 0.0
        %527 = vmatmul.mubr.f32.gmra.mxu0 %v341
        %v528 = vpop.f32.mrf.mxu0
        %v529 = vadd.f32 0.0, %v528
        %v530 = vpop.f32.mrf.mxu0
        %v531 = vadd.f32 0.0, %v530
        %532 = vmatprep.mubr.f32.mxu0 0.0
        %533 = vmatmul.mubr.f32.gmra.mxu0 %v344
        %v534 = vpop.f32.mrf.mxu0
        %v535 = vadd.f32 0.0, %v534
        %v536 = vpop.f32.mrf.mxu0
        %v537 = vadd.f32 0.0, %v536
        %538 = vmatprep.mubr.f32.mxu0 0.0
        %539 = vmatmul.mubr.f32.gmra.mxu0 %v347
        %v540 = vpop.f32.mrf.mxu0
        %v541 = vadd.f32 0.0, %v540
        %v542 = vpop.f32.mrf.mxu0
        %v543 = vadd.f32 0.0, %v542
        %544 = vmatprep.mubr.f32.mxu0 0.0
        %545 = vmatmul.mubr.f32.gmra.mxu0 %v350
        %v546 = vpop.f32.mrf.mxu0
        %v547 = vadd.f32 0.0, %v546
        %v548 = vpop.f32.mrf.mxu0
        %v549 = vadd.f32 0.0, %v548
        %550 = vmatprep.mubr.f32.mxu0 0.0
        %551 = vmatmul.mubr.f32.gmra.mxu0 %v353
        %v552 = vpop.f32.mrf.mxu0
        %v553 = vadd.f32 0.0, %v552
        %v554 = vpop.f32.mrf.mxu0
        %v555 = vadd.f32 0.0, %v554
        %556 = vmatprep.mubr.f32.mxu0 0.0
        %557 = vmatmul.mubr.f32.gmra.mxu0 %v356
        %v558 = vpop.f32.mrf.mxu0
        %v559 = vadd.f32 0.0, %v558
        %v560 = vpop.f32.mrf.mxu0
        %v561 = vadd.f32 0.0, %v560
        %562 = vmatprep.mubr.f32.mxu0 0.0
        %563 = vmatmul.mubr.f32.gmra.mxu0 %v359
        %v564 = vpop.f32.mrf.mxu0
        %v565 = vadd.f32 0.0, %v564
        %v566 = vpop.f32.mrf.mxu0
        %v567 = vadd.f32 0.0, %v566
        %568 = vmatprep.mubr.f32.mxu0 0.0
        %569 = vmatmul.mubr.f32.gmra.mxu0 %v362
        %v570 = vpop.f32.mrf.mxu0
        %v571 = vadd.f32 0.0, %v570
        %v572 = vpop.f32.mrf.mxu0
        %v573 = vadd.f32 0.0, %v572
        %574 = vmatprep.mubr.f32.mxu0 0.0
        %575 = vmatmul.mubr.f32.gmra.mxu0 %v365
        %v576 = vpop.f32.mrf.mxu0
        %v577 = vadd.f32 0.0, %v576
        %v578 = vpop.f32.mrf.mxu0
        %v579 = vadd.f32 0.0, %v578
        %580 = vmatprep.mubr.f32.mxu0 0.0
        %581 = vmatmul.mubr.f32.gmra.mxu0 %v368
        %v582 = vpop.f32.mrf.mxu0
        %v583 = vadd.f32 0.0, %v582
        %v584 = vpop.f32.mrf.mxu0
        %v585 = vadd.f32 0.0, %v584
        %586 = vmatprep.mubr.f32.mxu0 0.0
        %587 = vmatmul.mubr.f32.gmra.mxu0 %v371
        %v588 = vpop.f32.mrf.mxu0
        %v589 = vadd.f32 0.0, %v588
        %v590 = vpop.f32.mrf.mxu0
        %v591 = vadd.f32 0.0, %v590
        %592 = vmatprep.mubr.f32.mxu0 0.0
        %593 = vmatmul.mubr.f32.gmra.mxu0 %v374
        %v594 = vpop.f32.mrf.mxu0
        %v595 = vadd.f32 0.0, %v594
        %v596 = vpop.f32.mrf.mxu0
        %v597 = vadd.f32 0.0, %v596
        %598 = vmatprep.mubr.f32.mxu0 0.0
        %599 = vmatmul.mubr.f32.gmra.mxu0 %v377
        %v600 = vpop.f32.mrf.mxu0
        %v601 = vadd.f32 0.0, %v600
        %v602 = vpop.f32.mrf.mxu0
        %v603 = vadd.f32 0.0, %v602
        %604 = vmatprep.mubr.f32.mxu0 0.0
        %605 = vmatmul.mubr.f32.gmra.mxu0 %v380
        %v606 = vpop.f32.mrf.mxu0
        %v607 = vadd.f32 0.0, %v606
        %v608 = vpop.f32.mrf.mxu0
        %v609 = vadd.f32 0.0, %v608
        %610 = vmatprep.mubr.f32.mxu0 0.0
        %611 = vmatmul.mubr.f32.gmra.mxu0 %v383
        %v612 = vpop.f32.mrf.mxu0
        %v613 = vadd.f32 0.0, %v612
        %v614 = vpop.f32.mrf.mxu0
        %v615 = vadd.f32 0.0, %v614
        %616 = vmatprep.mubr.f32.mxu0 0.0
        %617 = vmatmul.mubr.f32.gmra.mxu0 %v386
        %v618 = vpop.f32.mrf.mxu0
        %v619 = vadd.f32 0.0, %v618
        %v620 = vpop.f32.mrf.mxu0
        %v621 = vadd.f32 0.0, %v620
        %622 = vmatprep.mubr.f32.mxu0 0.0
        %623 = vmatmul.mubr.f32.gmra.mxu0 %v389
        %v624 = vpop.f32.mrf.mxu0
        %v625 = vadd.f32 0.0, %v624
        %v626 = vpop.f32.mrf.mxu0
        %v627 = vadd.f32 0.0, %v626
        %628 = vmatprep.mubr.f32.mxu0 0.0
        %629 = vmatmul.mubr.f32.gmra.mxu0 %v392
        %v630 = vpop.f32.mrf.mxu0
        %v631 = vadd.f32 0.0, %v630
        %v632 = vpop.f32.mrf.mxu0
        %v633 = vadd.f32 0.0, %v632
        %634 = vmatprep.mubr.f32.mxu0 0.0
        %635 = vmatmul.mubr.f32.gmra.mxu0 %v395
        %v636 = vpop.f32.mrf.mxu0
        %v637 = vadd.f32 0.0, %v636
        %v638 = vpop.f32.mrf.mxu0
        %v639 = vadd.f32 0.0, %v638
        %640 = vmatprep.mubr.f32.mxu0 0.0
        %641 = vmatmul.mubr.f32.gmra.mxu0 %v398
        %v642 = vpop.f32.mrf.mxu0
        %v643 = vadd.f32 0.0, %v642
        %v644 = vpop.f32.mrf.mxu0
        %v645 = vadd.f32 0.0, %v644
        %646 = vmatprep.mubr.f32.mxu0 0.0
        %647 = vmatmul.mubr.f32.gmra.mxu0 %v401
        %v648 = vpop.f32.mrf.mxu0
        %v649 = vadd.f32 0.0, %v648
        %v650 = vpop.f32.mrf.mxu0
        %v651 = vadd.f32 0.0, %v650
        %652 = vmatprep.mubr.f32.mxu0 0.0
        %653 = vmatmul.mubr.f32.gmra.mxu0 %v404
        %v654 = vpop.f32.mrf.mxu0
        %v655 = vadd.f32 0.0, %v654
        %v656 = vpop.f32.mrf.mxu0
        %v657 = vadd.f32 0.0, %v656
        %658 = vmatprep.mubr.f32.mxu0 0.0
        %659 = vmatmul.mubr.f32.gmra.mxu0 %v407
        %v660 = vpop.f32.mrf.mxu0
        %v661 = vadd.f32 0.0, %v660
        %v662 = vpop.f32.mrf.mxu0
        %v663 = vadd.f32 0.0, %v662
        %664 = vmatprep.mubr.f32.mxu0 0.0
        %665 = vmatmul.mubr.f32.gmra.mxu0 %v410
        %v666 = vpop.f32.mrf.mxu0
        %v667 = vadd.f32 0.0, %v666
        %v668 = vpop.f32.mrf.mxu0
        %v669 = vadd.f32 0.0, %v668
        %670 = vmatprep.mubr.f32.mxu0 0.0
        %671 = vmatmul.mubr.f32.gmra.mxu0 %v413
        %v672 = vpop.f32.mrf.mxu0
        %v673 = vadd.f32 0.0, %v672
        %v674 = vpop.f32.mrf.mxu0
        %v675 = vadd.f32 0.0, %v674
        %676 = vdwg.mxu0
        %v677 = vmax.f32 %v487, %v499
        %v678 = vmax.f32 %v493, %v505
        %v679 = vmax.f32 %v677, %v511
        %v680 = vmax.f32 %v678, %v517
        %v681 = vmax.f32 %v679, %v523
        %v682 = vmax.f32 %v680, %v529
        %v683 = vmax.f32 %v681, %v535
        %v684 = vmax.f32 %v682, %v541
        %v685 = vmax.f32 %v683, %v547
        %v686 = vmax.f32 %v684, %v553
        %v687 = vmax.f32 %v685, %v559
        %v688 = vmax.f32 %v686, %v565
        %v689 = vmax.f32 %v687, %v571
        %v690 = vmax.f32 %v688, %v577
        %v691 = vmax.f32 %v689, %v583
        %v692 = vmax.f32 %v690, %v589
        %v693 = vmax.f32 %v691, %v595
        %v694 = vmax.f32 %v692, %v601
        %v695 = vmax.f32 %v693, %v607
        %v696 = vmax.f32 %v694, %v613
        %v697 = vmax.f32 %v695, %v619
        %v698 = vmax.f32 %v696, %v625
        %v699 = vmax.f32 %v697, %v631
        %v700 = vmax.f32 %v698, %v637
        %v701 = vmax.f32 %v699, %v643
        %v702 = vmax.f32 %v700, %v649
        %v703 = vmax.f32 %v701, %v655
        %v704 = vmax.f32 %v702, %v661
        %v705 = vmax.f32 %v703, %v667
        %v706 = vmax.f32 %v704, %v673
        %v707 = vmax.f32 %v705, %v706
        %v708 = vrot.slane %v707, 4
        %v709 = vmax.f32 %v707, %v708
        %v710 = vrot.slane %v709, 2
        %v711 = vmax.f32 %v709, %v710
        %v712 = vrot.slane %v711, 1
        %v713 = vmax.f32 %v711, %v712
        %v714 = vmax.f32 %v489, %v501
        %v715 = vmax.f32 %v495, %v507
        %v716 = vmax.f32 %v714, %v513
        %v717 = vmax.f32 %v715, %v519
        %v718 = vmax.f32 %v716, %v525
        %v719 = vmax.f32 %v717, %v531
        %v720 = vmax.f32 %v718, %v537
        %v721 = vmax.f32 %v719, %v543
        %v722 = vmax.f32 %v720, %v549
        %v723 = vmax.f32 %v721, %v555
        %v724 = vmax.f32 %v722, %v561
        %v725 = vmax.f32 %v723, %v567
        %v726 = vmax.f32 %v724, %v573
        %v727 = vmax.f32 %v725, %v579
        %v728 = vmax.f32 %v726, %v585
        %v729 = vmax.f32 %v727, %v591
        %v730 = vmax.f32 %v728, %v597
        %v731 = vmax.f32 %v729, %v603
        %v732 = vmax.f32 %v730, %v609
        %v733 = vmax.f32 %v731, %v615
        %v734 = vmax.f32 %v732, %v621
        %v735 = vmax.f32 %v733, %v627
        %v736 = vmax.f32 %v734, %v633
        %v737 = vmax.f32 %v735, %v639
        %v738 = vmax.f32 %v736, %v645
        %v739 = vmax.f32 %v737, %v651
        %v740 = vmax.f32 %v738, %v657
        %v741 = vmax.f32 %v739, %v663
        %v742 = vmax.f32 %v740, %v669
        %v743 = vmax.f32 %v741, %v675
        %v744 = vmax.f32 %v742, %v743
        %v745 = vrot.slane %v744, 4
        %v746 = vmax.f32 %v744, %v745
        %v747 = vrot.slane %v746, 2
        %v748 = vmax.f32 %v746, %v747
        %v749 = vrot.slane %v748, 1
        %v750 = vmax.f32 %v748, %v749
        %v751 = vlaneseq
        %v752 = vshrl.u32 %v751, 7
        %v753 = vadd.s32 %v752, 8
        %v754 = vadd.s32 %v752, 16
        %v755 = vadd.s32 %v752, 24
        %v756 = vadd.s32 %v752, 32
        %v757 = vadd.s32 %v752, 40
        %v758 = vadd.s32 %v752, 48
        %v759 = vadd.s32 %v752, 56
        %v760 = vadd.s32 %v752, 64
        %v761 = vadd.s32 %v752, 72
        %v762 = vadd.s32 %v752, 80
        %v763 = vadd.s32 %v752, 88
        %v764 = vadd.s32 %v752, 96
        %v765 = vadd.s32 %v752, 104
        %v766 = vadd.s32 %v752, 112
        %v767 = vadd.s32 %v752, 120
        %v768 = vadd.s32 %v752, 128
        %v769 = vadd.s32 %v752, 136
        %v770 = vadd.s32 %v752, 144
        %v771 = vadd.s32 %v752, 152
        %v772 = vadd.s32 %v752, 160
        %v773 = vadd.s32 %v752, 168
        %v774 = vadd.s32 %v752, 176
        %v775 = vadd.s32 %v752, 184
        %v776 = vadd.s32 %v752, 192
        %v777 = vadd.s32 %v752, 200
        %v778 = vadd.s32 %v752, 208
        %v779 = vadd.s32 %v752, 216
        %v780 = vadd.s32 %v752, 224
        %v781 = vadd.s32 %v752, 232
        %v782 = vadd.s32 %v752, 240
        %v783 = vadd.s32 %v752, 248
        %vm784 = vcmp.eq.f32.partialorder %v487, %v713
        %vm785 = vcmp.eq.f32.partialorder %v489, %v750
        %vm786 = vcmp.eq.f32.partialorder %v493, %v713
        %vm787 = vcmp.eq.f32.partialorder %v495, %v750
        %vm788 = vcmp.eq.f32.partialorder %v499, %v713
        %vm789 = vcmp.eq.f32.partialorder %v501, %v750
        %vm790 = vcmp.eq.f32.partialorder %v505, %v713
        %vm791 = vcmp.eq.f32.partialorder %v507, %v750
        %vm792 = vcmp.eq.f32.partialorder %v511, %v713
        %vm793 = vcmp.eq.f32.partialorder %v513, %v750
        %vm794 = vcmp.eq.f32.partialorder %v517, %v713
        %vm795 = vcmp.eq.f32.partialorder %v519, %v750
        %vm796 = vcmp.eq.f32.partialorder %v523, %v713
        %vm797 = vcmp.eq.f32.partialorder %v525, %v750
        %vm798 = vcmp.eq.f32.partialorder %v529, %v713
        %vm799 = vcmp.eq.f32.partialorder %v531, %v750
        %vm800 = vcmp.eq.f32.partialorder %v535, %v713
        %vm801 = vcmp.eq.f32.partialorder %v537, %v750
        %vm802 = vcmp.eq.f32.partialorder %v541, %v713
        %vm803 = vcmp.eq.f32.partialorder %v543, %v750
        %vm804 = vcmp.eq.f32.partialorder %v547, %v713
        %vm805 = vcmp.eq.f32.partialorder %v549, %v750
        %vm806 = vcmp.eq.f32.partialorder %v553, %v713
        %vm807 = vcmp.eq.f32.partialorder %v555, %v750
        %vm808 = vcmp.eq.f32.partialorder %v559, %v713
        %vm809 = vcmp.eq.f32.partialorder %v561, %v750
        %vm810 = vcmp.eq.f32.partialorder %v565, %v713
        %vm811 = vcmp.eq.f32.partialorder %v567, %v750
        %vm812 = vcmp.eq.f32.partialorder %v571, %v713
        %vm813 = vcmp.eq.f32.partialorder %v573, %v750
        %vm814 = vcmp.eq.f32.partialorder %v577, %v713
        %vm815 = vcmp.eq.f32.partialorder %v579, %v750
        %vm816 = vcmp.eq.f32.partialorder %v583, %v713
        %vm817 = vcmp.eq.f32.partialorder %v585, %v750
        %vm818 = vcmp.eq.f32.partialorder %v589, %v713
        %vm819 = vcmp.eq.f32.partialorder %v591, %v750
        %vm820 = vcmp.eq.f32.partialorder %v595, %v713
        %vm821 = vcmp.eq.f32.partialorder %v597, %v750
        %vm822 = vcmp.eq.f32.partialorder %v601, %v713
        %vm823 = vcmp.eq.f32.partialorder %v603, %v750
        %vm824 = vcmp.eq.f32.partialorder %v607, %v713
        %vm825 = vcmp.eq.f32.partialorder %v609, %v750
        %vm826 = vcmp.eq.f32.partialorder %v613, %v713
        %vm827 = vcmp.eq.f32.partialorder %v615, %v750
        %vm828 = vcmp.eq.f32.partialorder %v619, %v713
        %vm829 = vcmp.eq.f32.partialorder %v621, %v750
        %vm830 = vcmp.eq.f32.partialorder %v625, %v713
        %vm831 = vcmp.eq.f32.partialorder %v627, %v750
        %vm832 = vcmp.eq.f32.partialorder %v631, %v713
        %vm833 = vcmp.eq.f32.partialorder %v633, %v750
        %vm834 = vcmp.eq.f32.partialorder %v637, %v713
        %vm835 = vcmp.eq.f32.partialorder %v639, %v750
        %vm836 = vcmp.eq.f32.partialorder %v643, %v713
        %vm837 = vcmp.eq.f32.partialorder %v645, %v750
        %vm838 = vcmp.eq.f32.partialorder %v649, %v713
        %vm839 = vcmp.eq.f32.partialorder %v651, %v750
        %vm840 = vcmp.eq.f32.partialorder %v655, %v713
        %vm841 = vcmp.eq.f32.partialorder %v657, %v750
        %vm842 = vcmp.eq.f32.partialorder %v661, %v713
        %vm843 = vcmp.eq.f32.partialorder %v663, %v750
        %vm844 = vcmp.eq.f32.partialorder %v667, %v713
        %vm845 = vcmp.eq.f32.partialorder %v669, %v750
        %vm846 = vcmp.eq.f32.partialorder %v673, %v713
        %vm847 = vcmp.eq.f32.partialorder %v675, %v750
        %v848 = vsel %vm784, %v752, 256
        %v849 = vsel %vm785, %v752, 256
        %v850 = vsel %vm786, %v753, 256
        %v851 = vsel %vm787, %v753, 256
        %v852 = vsel %vm788, %v754, 256
        %v853 = vsel %vm789, %v754, 256
        %v854 = vsel %vm790, %v755, 256
        %v855 = vsel %vm791, %v755, 256
        %v856 = vsel %vm792, %v756, 256
        %v857 = vsel %vm793, %v756, 256
        %v858 = vsel %vm794, %v757, 256
        %v859 = vsel %vm795, %v757, 256
        %v860 = vsel %vm796, %v758, 256
        %v861 = vsel %vm797, %v758, 256
        %v862 = vsel %vm798, %v759, 256
        %v863 = vsel %vm799, %v759, 256
        %v864 = vsel %vm800, %v760, 256
        %v865 = vsel %vm801, %v760, 256
        %v866 = vsel %vm802, %v761, 256
        %v867 = vsel %vm803, %v761, 256
        %v868 = vsel %vm804, %v762, 256
        %v869 = vsel %vm805, %v762, 256
        %v870 = vsel %vm806, %v763, 256
        %v871 = vsel %vm807, %v763, 256
        %v872 = vsel %vm808, %v764, 256
        %v873 = vsel %vm809, %v764, 256
        %v874 = vsel %vm810, %v765, 256
        %v875 = vsel %vm811, %v765, 256
        %v876 = vsel %vm812, %v766, 256
        %v877 = vsel %vm813, %v766, 256
        %v878 = vsel %vm814, %v767, 256
        %v879 = vsel %vm815, %v767, 256
        %v880 = vsel %vm816, %v768, 256
        %v881 = vsel %vm817, %v768, 256
        %v882 = vsel %vm818, %v769, 256
        %v883 = vsel %vm819, %v769, 256
        %v884 = vsel %vm820, %v770, 256
        %v885 = vsel %vm821, %v770, 256
        %v886 = vsel %vm822, %v771, 256
        %v887 = vsel %vm823, %v771, 256
        %v888 = vsel %vm824, %v772, 256
        %v889 = vsel %vm825, %v772, 256
        %v890 = vsel %vm826, %v773, 256
        %v891 = vsel %vm827, %v773, 256
        %v892 = vsel %vm828, %v774, 256
        %v893 = vsel %vm829, %v774, 256
        %v894 = vsel %vm830, %v775, 256
        %v895 = vsel %vm831, %v775, 256
        %v896 = vsel %vm832, %v776, 256
        %v897 = vsel %vm833, %v776, 256
        %v898 = vsel %vm834, %v777, 256
        %v899 = vsel %vm835, %v777, 256
        %v900 = vsel %vm836, %v778, 256
        %v901 = vsel %vm837, %v778, 256
        %v902 = vsel %vm838, %v779, 256
        %v903 = vsel %vm839, %v779, 256
        %v904 = vsel %vm840, %v780, 256
        %v905 = vsel %vm841, %v780, 256
        %v906 = vsel %vm842, %v781, 256
        %v907 = vsel %vm843, %v781, 256
        %v908 = vsel %vm844, %v782, 256
        %v909 = vsel %vm845, %v782, 256
        %v910 = vsel %vm846, %v783, 256
        %v911 = vsel %vm847, %v783, 256
        %vm912 = vcmp.lt.s32.totalorder %v848, %v852
        %v913 = vsel %vm912, %v848, %v852
        %vm914 = vcmp.lt.s32.totalorder %v850, %v854
        %v915 = vsel %vm914, %v850, %v854
        %vm916 = vcmp.lt.s32.totalorder %v913, %v856
        %v917 = vsel %vm916, %v913, %v856
        %vm918 = vcmp.lt.s32.totalorder %v915, %v858
        %v919 = vsel %vm918, %v915, %v858
        %vm920 = vcmp.lt.s32.totalorder %v917, %v860
        %v921 = vsel %vm920, %v917, %v860
        %vm922 = vcmp.lt.s32.totalorder %v919, %v862
        %v923 = vsel %vm922, %v919, %v862
        %vm924 = vcmp.lt.s32.totalorder %v921, %v864
        %v925 = vsel %vm924, %v921, %v864
        %vm926 = vcmp.lt.s32.totalorder %v923, %v866
        %v927 = vsel %vm926, %v923, %v866
        %vm928 = vcmp.lt.s32.totalorder %v925, %v868
        %v929 = vsel %vm928, %v925, %v868
        %vm930 = vcmp.lt.s32.totalorder %v927, %v870
        %v931 = vsel %vm930, %v927, %v870
        %vm932 = vcmp.lt.s32.totalorder %v929, %v872
        %v933 = vsel %vm932, %v929, %v872
        %vm934 = vcmp.lt.s32.totalorder %v931, %v874
        %v935 = vsel %vm934, %v931, %v874
        %vm936 = vcmp.lt.s32.totalorder %v933, %v876
        %v937 = vsel %vm936, %v933, %v876
        %vm938 = vcmp.lt.s32.totalorder %v935, %v878
        %v939 = vsel %vm938, %v935, %v878
        %vm940 = vcmp.lt.s32.totalorder %v937, %v880
        %v941 = vsel %vm940, %v937, %v880
        %vm942 = vcmp.lt.s32.totalorder %v939, %v882
        %v943 = vsel %vm942, %v939, %v882
        %vm944 = vcmp.lt.s32.totalorder %v941, %v884
        %v945 = vsel %vm944, %v941, %v884
        %vm946 = vcmp.lt.s32.totalorder %v943, %v886
        %v947 = vsel %vm946, %v943, %v886
        %vm948 = vcmp.lt.s32.totalorder %v945, %v888
        %v949 = vsel %vm948, %v945, %v888
        %vm950 = vcmp.lt.s32.totalorder %v947, %v890
        %v951 = vsel %vm950, %v947, %v890
        %vm952 = vcmp.lt.s32.totalorder %v949, %v892
        %v953 = vsel %vm952, %v949, %v892
        %vm954 = vcmp.lt.s32.totalorder %v951, %v894
        %v955 = vsel %vm954, %v951, %v894
        %vm956 = vcmp.lt.s32.totalorder %v953, %v896
        %v957 = vsel %vm956, %v953, %v896
        %vm958 = vcmp.lt.s32.totalorder %v955, %v898
        %v959 = vsel %vm958, %v955, %v898
        %vm960 = vcmp.lt.s32.totalorder %v957, %v900
        %v961 = vsel %vm960, %v957, %v900
        %vm962 = vcmp.lt.s32.totalorder %v959, %v902
        %v963 = vsel %vm962, %v959, %v902
        %vm964 = vcmp.lt.s32.totalorder %v961, %v904
        %v965 = vsel %vm964, %v961, %v904
        %vm966 = vcmp.lt.s32.totalorder %v963, %v906
        %v967 = vsel %vm966, %v963, %v906
        %vm968 = vcmp.lt.s32.totalorder %v965, %v908
        %v969 = vsel %vm968, %v965, %v908
        %vm970 = vcmp.lt.s32.totalorder %v967, %v910
        %v971 = vsel %vm970, %v967, %v910
        %vm972 = vcmp.lt.s32.totalorder %v969, %v971
        %v973 = vsel %vm972, %v969, %v971
        %v974 = vrot.slane %v973, 4
        %vm975 = vcmp.lt.s32.totalorder %v973, %v974
        %v976 = vsel %vm975, %v973, %v974
        %v977 = vrot.slane %v976, 2
        %vm978 = vcmp.lt.s32.totalorder %v976, %v977
        %v979 = vsel %vm978, %v976, %v977
        %v980 = vrot.slane %v979, 1
        %vm981 = vcmp.lt.s32.totalorder %v979, %v980
        %v982 = vsel %vm981, %v979, %v980
        %vm983 = vcmp.lt.s32.totalorder %v849, %v853
        %v984 = vsel %vm983, %v849, %v853
        %vm985 = vcmp.lt.s32.totalorder %v851, %v855
        %v986 = vsel %vm985, %v851, %v855
        %vm987 = vcmp.lt.s32.totalorder %v984, %v857
        %v988 = vsel %vm987, %v984, %v857
        %vm989 = vcmp.lt.s32.totalorder %v986, %v859
        %v990 = vsel %vm989, %v986, %v859
        %vm991 = vcmp.lt.s32.totalorder %v988, %v861
        %v992 = vsel %vm991, %v988, %v861
        %vm993 = vcmp.lt.s32.totalorder %v990, %v863
        %v994 = vsel %vm993, %v990, %v863
        %vm995 = vcmp.lt.s32.totalorder %v992, %v865
        %v996 = vsel %vm995, %v992, %v865
        %vm997 = vcmp.lt.s32.totalorder %v994, %v867
        %v998 = vsel %vm997, %v994, %v867
        %vm999 = vcmp.lt.s32.totalorder %v996, %v869
        %v1000 = vsel %vm999, %v996, %v869
        %vm1001 = vcmp.lt.s32.totalorder %v998, %v871
        %v1002 = vsel %vm1001, %v998, %v871
        %vm1003 = vcmp.lt.s32.totalorder %v1000, %v873
        %v1004 = vsel %vm1003, %v1000, %v873
        %vm1005 = vcmp.lt.s32.totalorder %v1002, %v875
        %v1006 = vsel %vm1005, %v1002, %v875
        %vm1007 = vcmp.lt.s32.totalorder %v1004, %v877
        %v1008 = vsel %vm1007, %v1004, %v877
        %vm1009 = vcmp.lt.s32.totalorder %v1006, %v879
        %v1010 = vsel %vm1009, %v1006, %v879
        %vm1011 = vcmp.lt.s32.totalorder %v1008, %v881
        %v1012 = vsel %vm1011, %v1008, %v881
        %vm1013 = vcmp.lt.s32.totalorder %v1010, %v883
        %v1014 = vsel %vm1013, %v1010, %v883
        %vm1015 = vcmp.lt.s32.totalorder %v1012, %v885
        %v1016 = vsel %vm1015, %v1012, %v885
        %vm1017 = vcmp.lt.s32.totalorder %v1014, %v887
        %v1018 = vsel %vm1017, %v1014, %v887
        %vm1019 = vcmp.lt.s32.totalorder %v1016, %v889
        %v1020 = vsel %vm1019, %v1016, %v889
        %vm1021 = vcmp.lt.s32.totalorder %v1018, %v891
        %v1022 = vsel %vm1021, %v1018, %v891
        %vm1023 = vcmp.lt.s32.totalorder %v1020, %v893
        %v1024 = vsel %vm1023, %v1020, %v893
        %vm1025 = vcmp.lt.s32.totalorder %v1022, %v895
        %v1026 = vsel %vm1025, %v1022, %v895
        %vm1027 = vcmp.lt.s32.totalorder %v1024, %v897
        %v1028 = vsel %vm1027, %v1024, %v897
        %vm1029 = vcmp.lt.s32.totalorder %v1026, %v899
        %v1030 = vsel %vm1029, %v1026, %v899
        %vm1031 = vcmp.lt.s32.totalorder %v1028, %v901
        %v1032 = vsel %vm1031, %v1028, %v901
        %vm1033 = vcmp.lt.s32.totalorder %v1030, %v903
        %v1034 = vsel %vm1033, %v1030, %v903
        %vm1035 = vcmp.lt.s32.totalorder %v1032, %v905
        %v1036 = vsel %vm1035, %v1032, %v905
        %vm1037 = vcmp.lt.s32.totalorder %v1034, %v907
        %v1038 = vsel %vm1037, %v1034, %v907
        %vm1039 = vcmp.lt.s32.totalorder %v1036, %v909
        %v1040 = vsel %vm1039, %v1036, %v909
        %vm1041 = vcmp.lt.s32.totalorder %v1038, %v911
        %v1042 = vsel %vm1041, %v1038, %v911
        %vm1043 = vcmp.lt.s32.totalorder %v1040, %v1042
        %v1044 = vsel %vm1043, %v1040, %v1042
        %v1045 = vrot.slane %v1044, 4
        %vm1046 = vcmp.lt.s32.totalorder %v1044, %v1045
        %v1047 = vsel %vm1046, %v1044, %v1045
        %v1048 = vrot.slane %v1047, 2
        %vm1049 = vcmp.lt.s32.totalorder %v1047, %v1048
        %v1050 = vsel %vm1049, %v1047, %v1048
        %v1051 = vrot.slane %v1050, 1
        %vm1052 = vcmp.lt.s32.totalorder %v1050, %v1051
        %v1053 = vsel %vm1052, %v1050, %v1051
        %vm1054 = vcmp.eq.s32.totalorder %v752, %v982
        %vm1055 = vcmp.eq.s32.totalorder %v752, %v1053
        %vm1056 = vcmp.eq.s32.totalorder %v753, %v982
        %vm1057 = vcmp.eq.s32.totalorder %v753, %v1053
        %vm1058 = vcmp.eq.s32.totalorder %v754, %v982
        %vm1059 = vcmp.eq.s32.totalorder %v754, %v1053
        %vm1060 = vcmp.eq.s32.totalorder %v755, %v982
        %vm1061 = vcmp.eq.s32.totalorder %v755, %v1053
        %vm1062 = vcmp.eq.s32.totalorder %v756, %v982
        %vm1063 = vcmp.eq.s32.totalorder %v756, %v1053
        %vm1064 = vcmp.eq.s32.totalorder %v757, %v982
        %vm1065 = vcmp.eq.s32.totalorder %v757, %v1053
        %vm1066 = vcmp.eq.s32.totalorder %v758, %v982
        %vm1067 = vcmp.eq.s32.totalorder %v758, %v1053
        %vm1068 = vcmp.eq.s32.totalorder %v759, %v982
        %vm1069 = vcmp.eq.s32.totalorder %v759, %v1053
        %vm1070 = vcmp.eq.s32.totalorder %v760, %v982
        %vm1071 = vcmp.eq.s32.totalorder %v760, %v1053
        %vm1072 = vcmp.eq.s32.totalorder %v761, %v982
        %vm1073 = vcmp.eq.s32.totalorder %v761, %v1053
        %vm1074 = vcmp.eq.s32.totalorder %v762, %v982
        %vm1075 = vcmp.eq.s32.totalorder %v762, %v1053
        %vm1076 = vcmp.eq.s32.totalorder %v763, %v982
        %vm1077 = vcmp.eq.s32.totalorder %v763, %v1053
        %vm1078 = vcmp.eq.s32.totalorder %v764, %v982
        %vm1079 = vcmp.eq.s32.totalorder %v764, %v1053
        %vm1080 = vcmp.eq.s32.totalorder %v765, %v982
        %vm1081 = vcmp.eq.s32.totalorder %v765, %v1053
        %vm1082 = vcmp.eq.s32.totalorder %v766, %v982
        %vm1083 = vcmp.eq.s32.totalorder %v766, %v1053
        %vm1084 = vcmp.eq.s32.totalorder %v767, %v982
        %vm1085 = vcmp.eq.s32.totalorder %v767, %v1053
        %vm1086 = vcmp.eq.s32.totalorder %v768, %v982
        %vm1087 = vcmp.eq.s32.totalorder %v768, %v1053
        %vm1088 = vcmp.eq.s32.totalorder %v769, %v982
        %vm1089 = vcmp.eq.s32.totalorder %v769, %v1053
        %vm1090 = vcmp.eq.s32.totalorder %v770, %v982
        %vm1091 = vcmp.eq.s32.totalorder %v770, %v1053
        %vm1092 = vcmp.eq.s32.totalorder %v771, %v982
        %vm1093 = vcmp.eq.s32.totalorder %v771, %v1053
        %vm1094 = vcmp.eq.s32.totalorder %v772, %v982
        %vm1095 = vcmp.eq.s32.totalorder %v772, %v1053
        %vm1096 = vcmp.eq.s32.totalorder %v773, %v982
        %vm1097 = vcmp.eq.s32.totalorder %v773, %v1053
        %vm1098 = vcmp.eq.s32.totalorder %v774, %v982
        %vm1099 = vcmp.eq.s32.totalorder %v774, %v1053
        %vm1100 = vcmp.eq.s32.totalorder %v775, %v982
        %vm1101 = vcmp.eq.s32.totalorder %v775, %v1053
        %vm1102 = vcmp.eq.s32.totalorder %v776, %v982
        %vm1103 = vcmp.eq.s32.totalorder %v776, %v1053
        %vm1104 = vcmp.eq.s32.totalorder %v777, %v982
        %vm1105 = vcmp.eq.s32.totalorder %v777, %v1053
        %vm1106 = vcmp.eq.s32.totalorder %v778, %v982
        %vm1107 = vcmp.eq.s32.totalorder %v778, %v1053
        %vm1108 = vcmp.eq.s32.totalorder %v779, %v982
        %vm1109 = vcmp.eq.s32.totalorder %v779, %v1053
        %vm1110 = vcmp.eq.s32.totalorder %v780, %v982
        %vm1111 = vcmp.eq.s32.totalorder %v780, %v1053
        %vm1112 = vcmp.eq.s32.totalorder %v781, %v982
        %vm1113 = vcmp.eq.s32.totalorder %v781, %v1053
        %vm1114 = vcmp.eq.s32.totalorder %v782, %v982
        %vm1115 = vcmp.eq.s32.totalorder %v782, %v1053
        %vm1116 = vcmp.eq.s32.totalorder %v783, %v982
        %vm1117 = vcmp.eq.s32.totalorder %v783, %v1053
        %v1118 = vsel %vm1054, 1, 0
        %v1119 = vsel %vm1055, 1, 0
        %v1120 = vsel %vm1056, 1, 0
        %v1121 = vsel %vm1057, 1, 0
        %v1122 = vsel %vm1058, 1, 0
        %v1123 = vsel %vm1059, 1, 0
        %v1124 = vsel %vm1060, 1, 0
        %v1125 = vsel %vm1061, 1, 0
        %v1126 = vsel %vm1062, 1, 0
        %v1127 = vsel %vm1063, 1, 0
        %v1128 = vsel %vm1064, 1, 0
        %v1129 = vsel %vm1065, 1, 0
        %v1130 = vsel %vm1066, 1, 0
        %v1131 = vsel %vm1067, 1, 0
        %v1132 = vsel %vm1068, 1, 0
        %v1133 = vsel %vm1069, 1, 0
        %v1134 = vsel %vm1070, 1, 0
        %v1135 = vsel %vm1071, 1, 0
        %v1136 = vsel %vm1072, 1, 0
        %v1137 = vsel %vm1073, 1, 0
        %v1138 = vsel %vm1074, 1, 0
        %v1139 = vsel %vm1075, 1, 0
        %v1140 = vsel %vm1076, 1, 0
        %v1141 = vsel %vm1077, 1, 0
        %v1142 = vsel %vm1078, 1, 0
        %v1143 = vsel %vm1079, 1, 0
        %v1144 = vsel %vm1080, 1, 0
        %v1145 = vsel %vm1081, 1, 0
        %v1146 = vsel %vm1082, 1, 0
        %v1147 = vsel %vm1083, 1, 0
        %v1148 = vsel %vm1084, 1, 0
        %v1149 = vsel %vm1085, 1, 0
        %v1150 = vsel %vm1086, 1, 0
        %v1151 = vsel %vm1087, 1, 0
        %v1152 = vsel %vm1088, 1, 0
        %v1153 = vsel %vm1089, 1, 0
        %v1154 = vsel %vm1090, 1, 0
        %v1155 = vsel %vm1091, 1, 0
        %v1156 = vsel %vm1092, 1, 0
        %v1157 = vsel %vm1093, 1, 0
        %v1158 = vsel %vm1094, 1, 0
        %v1159 = vsel %vm1095, 1, 0
        %v1160 = vsel %vm1096, 1, 0
        %v1161 = vsel %vm1097, 1, 0
        %v1162 = vsel %vm1098, 1, 0
        %v1163 = vsel %vm1099, 1, 0
        %v1164 = vsel %vm1100, 1, 0
        %v1165 = vsel %vm1101, 1, 0
        %v1166 = vsel %vm1102, 1, 0
        %v1167 = vsel %vm1103, 1, 0
        %v1168 = vsel %vm1104, 1, 0
        %v1169 = vsel %vm1105, 1, 0
        %v1170 = vsel %vm1106, 1, 0
        %v1171 = vsel %vm1107, 1, 0
        %v1172 = vsel %vm1108, 1, 0
        %v1173 = vsel %vm1109, 1, 0
        %v1174 = vsel %vm1110, 1, 0
        %v1175 = vsel %vm1111, 1, 0
        %v1176 = vsel %vm1112, 1, 0
        %v1177 = vsel %vm1113, 1, 0
        %v1178 = vsel %vm1114, 1, 0
        %v1179 = vsel %vm1115, 1, 0
        %v1180 = vsel %vm1116, 1, 0
        %v1181 = vsel %vm1117, 1, 0
        %v1182 = vcvt.s32.f32 %v1118
        %v1183 = vcvt.s32.f32 %v1119
        %v1184 = vcvt.s32.f32 %v1120
        %v1185 = vcvt.s32.f32 %v1121
        %v1186 = vcvt.s32.f32 %v1122
        %v1187 = vcvt.s32.f32 %v1123
        %v1188 = vcvt.s32.f32 %v1124
        %v1189 = vcvt.s32.f32 %v1125
        %v1190 = vcvt.s32.f32 %v1126
        %v1191 = vcvt.s32.f32 %v1127
        %v1192 = vcvt.s32.f32 %v1128
        %v1193 = vcvt.s32.f32 %v1129
        %v1194 = vcvt.s32.f32 %v1130
        %v1195 = vcvt.s32.f32 %v1131
        %v1196 = vcvt.s32.f32 %v1132
        %v1197 = vcvt.s32.f32 %v1133
        %v1198 = vcvt.s32.f32 %v1134
        %v1199 = vcvt.s32.f32 %v1135
        %v1200 = vcvt.s32.f32 %v1136
        %v1201 = vcvt.s32.f32 %v1137
        %v1202 = vcvt.s32.f32 %v1138
        %v1203 = vcvt.s32.f32 %v1139
        %v1204 = vcvt.s32.f32 %v1140
        %v1205 = vcvt.s32.f32 %v1141
        %v1206 = vcvt.s32.f32 %v1142
        %v1207 = vcvt.s32.f32 %v1143
        %v1208 = vcvt.s32.f32 %v1144
        %v1209 = vcvt.s32.f32 %v1145
        %v1210 = vcvt.s32.f32 %v1146
        %v1211 = vcvt.s32.f32 %v1147
        %v1212 = vcvt.s32.f32 %v1148
        %v1213 = vcvt.s32.f32 %v1149
        %v1214 = vcvt.s32.f32 %v1150
        %v1215 = vcvt.s32.f32 %v1151
        %v1216 = vcvt.s32.f32 %v1152
        %v1217 = vcvt.s32.f32 %v1153
        %v1218 = vcvt.s32.f32 %v1154
        %v1219 = vcvt.s32.f32 %v1155
        %v1220 = vcvt.s32.f32 %v1156
        %v1221 = vcvt.s32.f32 %v1157
        %v1222 = vcvt.s32.f32 %v1158
        %v1223 = vcvt.s32.f32 %v1159
        %v1224 = vcvt.s32.f32 %v1160
        %v1225 = vcvt.s32.f32 %v1161
        %v1226 = vcvt.s32.f32 %v1162
        %v1227 = vcvt.s32.f32 %v1163
        %v1228 = vcvt.s32.f32 %v1164
        %v1229 = vcvt.s32.f32 %v1165
        %v1230 = vcvt.s32.f32 %v1166
        %v1231 = vcvt.s32.f32 %v1167
        %v1232 = vcvt.s32.f32 %v1168
        %v1233 = vcvt.s32.f32 %v1169
        %v1234 = vcvt.s32.f32 %v1170
        %v1235 = vcvt.s32.f32 %v1171
        %v1236 = vcvt.s32.f32 %v1172
        %v1237 = vcvt.s32.f32 %v1173
        %v1238 = vcvt.s32.f32 %v1174
        %v1239 = vcvt.s32.f32 %v1175
        %v1240 = vcvt.s32.f32 %v1176
        %v1241 = vcvt.s32.f32 %v1177
        %v1242 = vcvt.s32.f32 %v1178
        %v1243 = vcvt.s32.f32 %v1179
        %v1244 = vcvt.s32.f32 %v1180
        %v1245 = vcvt.s32.f32 %v1181
        %1246 = vmatprep.subr.mxu0 %v1213
        %1247 = vmatpush1.msra.mxu0 %v1212
        %1248 = vmatprep.subr.mxu0 %v1211
        %1249 = vmatpush1.msra.mxu0 %v1210
        %1250 = vmatprep.subr.mxu0 %v1209
        %1251 = vmatpush1.msra.mxu0 %v1208
        %1252 = vmatprep.subr.mxu0 %v1207
        %1253 = vmatpush1.msra.mxu0 %v1206
        %1254 = vmatprep.subr.mxu0 %v1205
        %1255 = vmatpush1.msra.mxu0 %v1204
        %1256 = vmatprep.subr.mxu0 %v1203
        %1257 = vmatpush1.msra.mxu0 %v1202
        %1258 = vmatprep.subr.mxu0 %v1201
        %1259 = vmatpush1.msra.mxu0 %v1200
        %1260 = vmatprep.subr.mxu0 %v1199
        %1261 = vmatpush1.msra.mxu0 %v1198
        %1262 = vmatprep.subr.mxu0 %v1197
        %1263 = vmatpush1.msra.mxu0 %v1196
        %1264 = vmatprep.subr.mxu0 %v1195
        %1265 = vmatpush1.msra.mxu0 %v1194
        %1266 = vmatprep.subr.mxu0 %v1193
        %1267 = vmatpush1.msra.mxu0 %v1192
        %1268 = vmatprep.subr.mxu0 %v1191
        %1269 = vmatpush1.msra.mxu0 %v1190
        %1270 = vmatprep.subr.mxu0 %v1189
        %1271 = vmatpush1.msra.mxu0 %v1188
        %1272 = vmatprep.subr.mxu0 %v1187
        %1273 = vmatpush1.msra.mxu0 %v1186
        %1274 = vmatprep.subr.mxu0 %v1185
        %1275 = vmatpush1.msra.mxu0 %v1184
        %1276 = vmatprep.subr.mxu0 %v1183
        %1277 = vmatpush1.msra.mxu0 %v1182
        %1278 = vmatprep.subr.mxu0 %v1245
        %1279 = vmatpush2.msra.mxu0 %v1244
        %1280 = vmatprep.subr.mxu0 %v1243
        %1281 = vmatpush2.msra.mxu0 %v1242
        %1282 = vmatprep.subr.mxu0 %v1241
        %1283 = vmatpush2.msra.mxu0 %v1240
        %1284 = vmatprep.subr.mxu0 %v1239
        %1285 = vmatpush2.msra.mxu0 %v1238
        %1286 = vmatprep.subr.mxu0 %v1237
        %1287 = vmatpush2.msra.mxu0 %v1236
        %1288 = vmatprep.subr.mxu0 %v1235
        %1289 = vmatpush2.msra.mxu0 %v1234
        %1290 = vmatprep.subr.mxu0 %v1233
        %1291 = vmatpush2.msra.mxu0 %v1232
        %1292 = vmatprep.subr.mxu0 %v1231
        %1293 = vmatpush2.msra.mxu0 %v1230
        %1294 = vmatprep.subr.mxu0 %v1229
        %1295 = vmatpush2.msra.mxu0 %v1228
        %1296 = vmatprep.subr.mxu0 %v1227
        %1297 = vmatpush2.msra.mxu0 %v1226
        %1298 = vmatprep.subr.mxu0 %v1225
        %1299 = vmatpush2.msra.mxu0 %v1224
        %1300 = vmatprep.subr.mxu0 %v1223
        %1301 = vmatpush2.msra.mxu0 %v1222
        %1302 = vmatprep.subr.mxu0 %v1221
        %1303 = vmatpush2.msra.mxu0 %v1220
        %1304 = vmatprep.subr.mxu0 %v1219
        %1305 = vmatpush2.msra.mxu0 %v1218
        %1306 = vmatprep.subr.mxu0 %v1217
        %1307 = vmatpush2.msra.mxu0 %v1216
        %1308 = vmatprep.subr.mxu0 %v1215
        %1309 = vmatpush2.msra.mxu0 %v1214
        %1310 = vmatprep.mubr.f32.mxu0 %v315
        %1311 = vmatmul.mubr.f32.gmra.mxu0 %v314
        %v1312 = vpop.f32.mrf.mxu0
        %v1313 = vadd.f32 0.0, %v1312
        %v1314 = vpop.f32.mrf.mxu0
        %v1315 = vadd.f32 0.0, %v1314
        %1316 = vdwg.mxu0
        %1317 = vst [vmem:[%s258] sm:$0xff] %v1313
        %1318 = vst [vmem:[%s258 + $0x8] sm:$0xff] %v1315
        %v1319 = vmul.f32 %v281, %v281
        %v1321 = vcombine.high %v1319, %v1319
        %v1323 = vsel %vm415, %v1319, 0.0
        %v1324 = vrot.slane %v1323, 4
        %v1325 = vadd.f32 %v1323, %v1324
        %v1326 = vrot.slane %v1325, 2
        %v1327 = vadd.f32 %v1325, %v1326
        %v1328 = vrot.slane %v1327, 1
        %v1329 = vadd.f32 %v1327, %v1328
        %v1330 = vsel %vm415, %v1321, 0.0
        %v1331 = vrot.slane %v1330, 4
        %v1332 = vadd.f32 %v1330, %v1331
        %v1333 = vrot.slane %v1332, 2
        %v1334 = vadd.f32 %v1332, %v1333
        %v1335 = vrot.slane %v1334, 1
        %v1336 = vadd.f32 %v1334, %v1335
        %v1337 = vrsqrt.pop %v1329
        %v1338 = vmul.f32 %v1329, %v1337
        %vm1339 = vcmp.eq.f32.partialorder %v1329, inf
        %v1340 = vsel %vm1339, %v1329, %v1338
        %vm1341 = vcmp.eq.f32.partialorder %v1329, 0.0
        %v1342 = vand.u32 %v1329, 2147483648
        %v1343 = vsel %vm1341, %v1342, %v1340
        %v1344 = vrsqrt.pop %v1336
        %v1345 = vmul.f32 %v1336, %v1344
        %vm1346 = vcmp.eq.f32.partialorder %v1336, inf
        %v1347 = vsel %vm1346, %v1336, %v1345
        %vm1348 = vcmp.eq.f32.partialorder %v1336, 0.0
        %v1349 = vand.u32 %v1336, 2147483648
        %v1350 = vsel %vm1348, %v1349, %v1347
        %v1351 = vmax.f32 %v1343, 1e-12
        %v1352 = vmax.f32 %v1350, 1e-12
        %v1353 = vrcp.pop %v1351
        %v1354 = vmul.f32 %v713, %v1353
        %v1355 = vrcp.pop %v1352
        %v1356 = vmul.f32 %v750, %v1355
        %v1359 = vcombine.low %v1354, %v1356
        %v1361 = vunpack.c.l.s4 1966171168
        %v1362 = vunpack.c.0.s8 %v1361
        %v1363 = vlaneseq
        %v1364 = vshrl.u32 %v1363, 7
        %v1365 = vsub.s32 %v1362, %v1364
        %v1366 = vrot.slane %v1359, %v1365
        %v1368 = vunpack.c.l.s4 1966171168
        %v1369 = vunpack.c.0.s8 %v1368
        %v1370 = vlaneseq
        %v1371 = vshrl.u32 %v1370, 7
        %v1372 = vsub.s32 %v1369, %v1371
        %v1373 = vrot.slane %v1366, %v1372
        %v1375 = vlaneseq
        %vm1376 = vcmp.ge.s32.totalorder %v1375, 0
        %vm1377 = vcmp.lt.s32.totalorder %v1375, 256
        %vm1378 = vmand %vm1376, %vm1377
        %1379 = vst.msk [vmem:[%s251] sm:$0x3] %vm1378, %v1373
        %s1380 = sand.u32 %s124, 1
        %s1381 = scalar_lea.sflag [#allocation3], %s1380
        %s1382 = sand.u32 %s124, 1
        %s1383 = smul.addr %s1382, 2
        %s1384 = scalar_lea.vmem [#allocation2], %s1383
        %s1385 = sand.u32 %s152, 1
        %s1386 = scalar_lea.sflag [#allocation5], %s1385
        %s1387 = sand.u32 %s152, 1
        %s1388 = smul.addr %s1387, 16
        %s1389 = scalar_lea.vmem [#allocation4], %s1388
        // Predicated region
        $region33: #{tpu_custom_call.1} parent=31 // pred_check
          %p1390 = pneg %p134
        $region34: #{tpu_custom_call.1} parent=31 // pred_check_branch
          %1392 = sbr.rel (%p1390) target = $region36
        $region35: #{tpu_custom_call.1} parent=31 // pred_region
          %s1393 = smul.u32 2, %s27
          %s1395 = ssub.s32 32, 32
          %1396 = vsyncadd %s1381, %s1395
          %s1397 = smul.addr %s26, 2
          %s1398 = sadd.s32 %s1393, %s1397
          %s1399 = smul.addr %s1398, 16
          %s1400 = scalar_lea.hbm %s3, %s1399
          %s1402 = sshll.u32 %s1384, 4
          %s1403 = int_to_ptr.vmem [resolvable:$true] %s1402
          %1405 = dma.vmem_to_hbm [thread:$0]  %s1403, 32, %s1400, %s1381
        $region36: #{tpu_custom_call.1} parent=31 // pred_fallthru
          _
        // Predicated region
        $region37: #{tpu_custom_call.1} parent=31 // pred_check
          %p1406 = pneg %p162
        $region38: #{tpu_custom_call.1} parent=31 // pred_check_branch
          %1408 = sbr.rel (%p1406) target = $region40
        $region39: #{tpu_custom_call.1} parent=31 // pred_region
          %s1409 = smul.u32 2, %s27
          %s1411 = ssub.s32 256, 256
          %1412 = vsyncadd %s1386, %s1411
          %s1413 = smul.addr %s26, 2
          %s1414 = sadd.s32 %s1409, %s1413
          %s1415 = smul.addr %s1414, 128
          %s1416 = scalar_lea.hbm %s4, %s1415
          %s1418 = sshll.u32 %s1389, 4
          %s1419 = int_to_ptr.vmem [resolvable:$true] %s1418
          %1421 = dma.vmem_to_hbm [thread:$0]  %s1419, 256, %s1416, %s1386
        $region40: #{tpu_custom_call.1} parent=31 // pred_fallthru
          _
      $region32: #{tpu_custom_call.1} parent=5 // pred_fallthru
        _
      %p1422 = scmp.le.s32.totalorder 2, %s17
      // Predicated region
      $region41: #{tpu_custom_call.1} parent=5 // pred_check
        %p1423 = pneg %p1422
      $region42: #{tpu_custom_call.1} parent=5 // pred_check_branch
        %1425 = sbr.rel (%p1423) target = $region44
      $region43: #{tpu_custom_call.1} parent=5 // pred_region
        %s1426 = ssub.s32 %s17, 2
        // Predicated region
        $region45: #{tpu_custom_call.1} parent=43 // pred_check
          %p1427 = pneg %p140
        $region46: #{tpu_custom_call.1} parent=43 // pred_check_branch
          %1429 = sbr.rel (%p1427) target = $region48
        $region47: #{tpu_custom_call.1} parent=43 // pred_region
          %s1430 = sand.u32 %s125, 1
          %s1431 = scalar_lea.sflag [#allocation3], %s1430
          %s1432 = sand.u32 %s125, 1
          %s1433 = smul.addr %s1432, 2
          %s1434 = scalar_lea.vmem [#allocation2], %s1433
          %1435 = dma.done %s1431, 32
        $region48: #{tpu_custom_call.1} parent=43 // pred_fallthru
          _
        // Predicated region
        $region49: #{tpu_custom_call.1} parent=43 // pred_check
          %p1436 = pneg %p168
        $region50: #{tpu_custom_call.1} parent=43 // pred_check_branch
          %1438 = sbr.rel (%p1436) target = $region52
        $region51: #{tpu_custom_call.1} parent=43 // pred_region
          %s1439 = sand.u32 %s153, 1
          %s1440 = scalar_lea.sflag [#allocation5], %s1439
          %s1441 = sand.u32 %s153, 1
          %s1442 = smul.addr %s1441, 16
          %s1443 = scalar_lea.vmem [#allocation4], %s1442
          %1444 = dma.done %s1440, 256
        $region52: #{tpu_custom_call.1} parent=43 // pred_fallthru
          _
      $region44: #{tpu_custom_call.1} parent=5 // pred_fallthru
        _
    $region6: #{tpu_custom_call.1} parent=1 // loop_footer
      %s21 = sadd.s32 1, %s17
    $region7: #{tpu_custom_call.1} parent=1 // loop_footer_branch
      %16 = sbr.rel target = $region3
    $region8: #{tpu_custom_call.1} parent=1 // loop_exit
      _
    %1445 = vsyncpa [#allocation3], 1
    %s1446 = scalar_lea.sflag [#allocation3], 1
    %1447 = vsyncpa %s1446, 1
    %1448 = vsyncpa [#allocation5], 1
    %s1449 = scalar_lea.sflag [#allocation5], 1
    %1450 = vsyncpa %s1449, 1

</llo_original>
